<compile_context>
chip_gen: v5e
topology: v5e:2x2
jax: 0.10.0
libtpu: 0.0.40
codegen_flags: <defaults>
</compile_context>

<pallas_src>
import jax
import jax.numpy as jnp
from jax.experimental import pallas as pl
from jax.experimental.pallas import tpu as pltpu


# ----------------------------------------------------------------------------
# helpers
# ----------------------------------------------------------------------------
def _round_up(x, m):
    return (x + m - 1) // m * m


def _pad2(a, rows, cols):
    pr, pc = rows - a.shape[0], cols - a.shape[1]
    if pr or pc:
        a = jnp.pad(a, ((0, pr), (0, pc)))
    return a


def _tile_caps():
    """Generation-aware tile caps and scoped-VMEM limit."""
    vmem = 64 * 1024 * 1024
    try:
        info = pltpu.get_tpu_info()
        vmem = getattr(info, "vmem_capacity_bytes", vmem)
    except Exception:
        pass
    if vmem >= 96 * 1024 * 1024:
        # v5e / v6e: 128 MiB physical VMEM -> big tiles, high scoped limit.
        return (512, 512, 1024), 100 * 1024 * 1024
    # v7x: 64 MiB physical per TC -> smaller caps, leave headroom.
    return (256, 512, 1024), 44 * 1024 * 1024


# ----------------------------------------------------------------------------
# kernels: tiled matmul + bias (weights already perturbed, transposed, bf16)
# ----------------------------------------------------------------------------
def _matmul_bias_kernel(x_ref, w_ref, b_ref, o_ref, acc_ref):
    """o[i,j] = sum_k x[i,k] @ w[k,j] + b[j]; f32 accumulation in VMEM."""
    k = pl.program_id(2)

    @pl.when(k == 0)
    def _():
        acc_ref[...] = jnp.zeros_like(acc_ref)

    acc_ref[...] += jnp.dot(x_ref[...], w_ref[...],
                            preferred_element_type=jnp.float32)

    @pl.when(k == pl.num_programs(2) - 1)
    def _():
        o_ref[...] = (acc_ref[...] + b_ref[...]).astype(o_ref.dtype)


def _matmul_bias_single_k_kernel(x_ref, w_ref, b_ref, o_ref):
    """Fast path when the whole K dimension fits in a single tile:
    no scratch accumulator, no zero-init, no finalize copy."""
    o_ref[...] = (jnp.dot(x_ref[...], w_ref[...],
                          preferred_element_type=jnp.float32)
                  + b_ref[...]).astype(o_ref.dtype)


# ----------------------------------------------------------------------------
# wrapper
# ----------------------------------------------------------------------------
def perturbed_linear(x, w_mean, w_var, w_noise, b_mean, b_var, b_noise,
                     *, mxu_dtype=jnp.bfloat16):
    """PerturbedLinear.forward.

    x: (..., K); w_*: (N, K); b_*: (N,). Returns (..., N) in x.dtype.
    mxu_dtype=jnp.float32 gives an exact-precision (slower MXU) path.
    """
    orig_shape = x.shape
    K = orig_shape[-1]
    N = w_mean.shape[0]
    x2d = x.reshape(-1, K)
    M = x2d.shape[0]
    out_dtype = x.dtype

    # --- perturbation (x-independent) hoisted out of the hot loop ----------
    # W_pert^T: (K, N) in MXU dtype; b_pert: (1, N) f32.  Computed once per
    # call; XLA fuses the elementwise math, the transpose and the pad below.
    w_pert_t = (w_mean + jax.nn.softplus(w_var) * w_noise).T.astype(mxu_dtype)
    b_pert = (b_mean + jax.nn.softplus(b_var) * b_noise).astype(jnp.float32)

    # --- tiling -------------------------------------------------------------
    (cap_m, cap_n, cap_k), vmem_limit = _tile_caps()
    tm = min(cap_m, _round_up(M, 16))    # 16: bf16 sublane packing
    tn = min(cap_n, _round_up(N, 128))   # lane-dense output tiles
    tk = min(cap_k, _round_up(K, 128))
    Mp, Np, Kp = _round_up(M, tm), _round_up(N, tn), _round_up(K, tk)

    # Pad AFTER the perturbation: one bf16 weight slab instead of 3 f32
    # arrays.  Zero-padded x columns / weight rows contribute 0 to the matmul
    # and the padded output rows/cols are sliced off below.
    x2d = _pad2(x2d.astype(mxu_dtype), Mp, Kp)
    w_pt = _pad2(w_pert_t, Kp, Np)
    b_p = _pad2(b_pert.reshape(1, N), 1, Np)

    n_k = Kp // tk

    cost = pl.CostEstimate(
        flops=2 * Mp * Np * Kp,
        transcendentals=0,               # softplus done in XLA glue
        bytes_accessed=(
            (Np // tn) * Mp * Kp * jnp.dtype(mxu_dtype).itemsize   # x re-read per N tile
            + (Mp // tm) * Kp * Np * jnp.dtype(mxu_dtype).itemsize # W re-read per M tile
            + Mp * Np * jnp.dtype(out_dtype).itemsize              # output, once
            + (Mp // tm) * Np * 4                                  # bias
        ),
    )

    if n_k == 1:
        out = pl.pallas_call(
            _matmul_bias_single_k_kernel,
            out_shape=jax.ShapeDtypeStruct((Mp, Np), out_dtype),
            grid_spec=pltpu.PrefetchScalarGridSpec(
                num_scalar_prefetch=0,
                grid=(Mp // tm, Np // tn),
                in_specs=[
                    pl.BlockSpec((tm, tk), lambda i, j: (i, 0)),   # x  (bf16)
                    pl.BlockSpec((tk, tn), lambda i, j: (0, j)),   # W^T (bf16)
                    pl.BlockSpec((1, tn), lambda i, j: (0, j)),    # bias (f32)
                ],
                out_specs=pl.BlockSpec((tm, tn), lambda i, j: (i, j)),
            ),
            compiler_params=pltpu.CompilerParams(
                dimension_semantics=("parallel", "parallel"),
                vmem_limit_bytes=vmem_limit,
            ),
            cost_estimate=cost,
        )(x2d, w_pt, b_p)
    else:
        out = pl.pallas_call(
            _matmul_bias_kernel,
            out_shape=jax.ShapeDtypeStruct((Mp, Np), out_dtype),
            grid_spec=pltpu.PrefetchScalarGridSpec(
                num_scalar_prefetch=0,
                grid=(Mp // tm, Np // tn, n_k),
                in_specs=[
                    pl.BlockSpec((tm, tk), lambda i, j, k: (i, k)),   # x
                    pl.BlockSpec((tk, tn), lambda i, j, k: (k, j)),   # W^T
                    pl.BlockSpec((1, tn), lambda i, j, k: (0, j)),    # bias
                ],
                out_specs=pl.BlockSpec((tm, tn), lambda i, j, k: (i, j)),
                scratch_shapes=[pltpu.VMEM((tm, tn), jnp.float32)],
            ),
            compiler_params=pltpu.CompilerParams(
                dimension_semantics=("parallel", "parallel", "arbitrary"),
                vmem_limit_bytes=vmem_limit,
            ),
            cost_estimate=cost,
        )(x2d, w_pt, b_p)

    out = out[:M, :N]
    return out.reshape(*orig_shape[:-1], N)


# ----------------------------------------------------------------------------
# demo / self-check
# ----------------------------------------------------------------------------
if __name__ == "__main__":
    # Shapes implied by the module: Linear(in_features, out_features) applied
    # to x of shape (batch, seq, in_features).
    batch, seq, in_features, out_features = 2, 8, 32, 32
    init_var = -4.0   # PerturbedLayer default: nn.init.constant_(var, -4.0)

    key = jax.random.PRNGKey(0)
    k_x, k_w, k_b, k_wn, k_bn = jax.random.split(key, 5)

    x = jax.random.normal(k_x, (batch, seq, in_features), dtype=jnp.float32)

    # posterior_mean Linear parameters (deterministic synthetic init)
    bound = 1.0 / jnp.sqrt(in_features)
    w_mean = jax.random.uniform(k_w, (out_features, in_features),
                                minval=-bound, maxval=bound, dtype=jnp.float32)
    b_mean = jax.random.uniform(k_b, (out_features,),
                                minval=-bound, maxval=bound, dtype=jnp.float32)

    # posterior_var parameters: constant init_var
    w_var = jnp.full((out_features, in_features), init_var, dtype=jnp.float32)
    b_var = jnp.full((out_features,), init_var, dtype=jnp.float32)

    # torch.randn equivalents (drawn deterministically in plain JAX glue)
    w_noise = jax.random.normal(k_wn, (out_features, in_features),
                                dtype=jnp.float32)
    b_noise = jax.random.normal(k_bn, (out_features,), dtype=jnp.float32)

    y = perturbed_linear(x, w_mean, w_var, w_noise, b_mean, b_var, b_noise)
    y = jax.block_until_ready(y)

    # reference check in plain JAX (f32); bf16 MXU operands -> loose tolerance
    sp = jax.nn.softplus
    w_p = w_mean + sp(w_var) * w_noise
    b_p = b_mean + sp(b_var) * b_noise
    y_ref = jnp.einsum("bsk,nk->bsn", x, w_p) + b_p
    assert y.shape == (batch, seq, out_features)
    assert jnp.allclose(y, y_ref, atol=1e-2, rtol=1e-2)

    print("KERNEL_OK")
</pallas_src>

<mosaic_0001>
module attributes {stable_mosaic.version = 11 : i64} {
  func.func @_matmul_bias_single_k_kernel(%arg0: i32, %arg1: i32, %arg2: memref<16x128xbf16, #tpu.memory_space<vmem>>, %arg3: memref<128x128xbf16, #tpu.memory_space<vmem>>, %arg4: memref<1x128xf32, #tpu.memory_space<vmem>>, %arg5: memref<16x128xf32, #tpu.memory_space<vmem>>) attributes {dimension_semantics = [#tpu.dimension_semantics<parallel>, #tpu.dimension_semantics<parallel>], iteration_bounds = array<i64: 1, 1>, scalar_prefetch = 0 : i64, scratch_operands = 0 : i64, tpu.core_type = #tpu.core_type<tc>, window_params = [{transform_indices = @transform_0, window_bounds = array<i64: 16, 128>}, {transform_indices = @transform_1, window_bounds = array<i64: 128, 128>}, {transform_indices = @transform_2, window_bounds = array<i64: 1, 128>}, {transform_indices = @transform_3, window_bounds = array<i64: 16, 128>}]} {
    %c0 = arith.constant 0 : index
    %c0_0 = arith.constant 0 : index
    %0 = vector.load %arg2[%c0, %c0_0] : memref<16x128xbf16, #tpu.memory_space<vmem>>, vector<16x128xbf16>
    %c0_1 = arith.constant 0 : index
    %c0_2 = arith.constant 0 : index
    %1 = vector.load %arg3[%c0_1, %c0_2] : memref<128x128xbf16, #tpu.memory_space<vmem>>, vector<128x128xbf16>
    %cst = arith.constant dense<0.000000e+00> : vector<16x128xf32>
    %2 = tpu.matmul %0, %1, %cst {dimension_numbers = #tpu.dot_dimension_numbers<[1], [0], [0], [1], [0, 0, 1, 1], [], []>} : vector<16x128xbf16>, vector<128x128xbf16>, vector<16x128xf32> -> vector<16x128xf32>
    %c0_3 = arith.constant 0 : index
    %c0_4 = arith.constant 0 : index
    %3 = vector.load %arg4[%c0_3, %c0_4] : memref<1x128xf32, #tpu.memory_space<vmem>>, vector<1x128xf32>
    %4 = vector.broadcast %3 : vector<1x128xf32> to vector<16x128xf32>
    %5 = arith.addf %2, %4 : vector<16x128xf32>
    %c0_5 = arith.constant 0 : index
    %c0_6 = arith.constant 0 : index
    %6 = vector.load %arg5[%c0_5, %c0_6] : memref<16x128xf32, #tpu.memory_space<vmem>>, vector<16x128xf32>
    tpu.vector_store %arg5[%c0_5, %c0_6], %5 {strides = array<i32>} : memref<16x128xf32, #tpu.memory_space<vmem>>, vector<16x128xf32>,
    return
  }
  func.func @transform_0(%arg0: i32, %arg1: i32) -> (i32, i32) {
    %c0_i32 = arith.constant 0 : i32
    %c0_i32_0 = arith.constant 0 : i32
    return %arg0, %c0_i32 : i32, i32
  }
  func.func @transform_1(%arg0: i32, %arg1: i32) -> (i32, i32) {
    %c0_i32 = arith.constant 0 : i32
    %c0_i32_0 = arith.constant 0 : i32
    return %c0_i32, %arg1 : i32, i32
  }
  func.func @transform_2(%arg0: i32, %arg1: i32) -> (i32, i32) {
    %c0_i32 = arith.constant 0 : i32
    %c0_i32_0 = arith.constant 0 : i32
    return %c0_i32, %arg1 : i32, i32
  }
  func.func @transform_3(%arg0: i32, %arg1: i32) -> (i32, i32) {
    %c0_i32 = arith.constant 0 : i32
    return %arg0, %arg1 : i32, i32
  }
}

</mosaic_0001>

<llo_original>
// kernel: tpu_custom_call.1
$region0: #{tpu_custom_call.1}
  #allocation0 [shape = 'u32[]', space=smem, size = 0x4, offset = 0x4, fixed_abs, tag = 'smem constant byte address 0x4 - core index']
  #allocation1 [shape = 'u32[72,128]{1,0:T(1,128)}', space=vmem, size = 0x9000, scoped, tag = 'internal scratch']
  %s0 = inlined_call_operand.hbm [shape: bf16[16,128], index: 0, kind: input, shape index: {}]
  %s1 = inlined_call_operand.hbm [shape: bf16[128,128], index: 1, kind: input, shape index: {}]
  %s2 = inlined_call_operand.vmem [shape: f32[1,128], index: 2, kind: input, shape index: {}]
  %s3 = inlined_call_operand.hbm [shape: f32[16,128], index: 3, kind: output, shape index: {}]
  %s4 = sld [smem:[#allocation0]]
  $region30: #{tpu_custom_call.1} parent=0
    _
  %s6 = ssub.s32 1, %s4
  %s7 = scalar_select 0, %s6, %s4
  $region1: #{tpu_custom_call.1} parent=0
    #allocation2 [shape = 'u8[4096]{0}', space=vmem, size = 0x1000, scoped, tag = 'input window, operand 0, single buffered']
    #allocation3 [shape = 's32[1]{0}', space=sflag, size = 0x4, scoped, tag = 'scoped memory for tpu_custom_call.1']
    #allocation4 [shape = 's32[1]{0}', space=sflag, size = 0x4, scoped, tag = 'scoped memory for tpu_custom_call.1']
    #allocation5 [shape = 'u8[32768]{0}', space=vmem, size = 0x8000, scoped, tag = 'input window, operand 1, single buffered']
    #allocation6 [shape = 's32[1]{0}', space=sflag, size = 0x4, scoped, tag = 'scoped memory for tpu_custom_call.1']
    #allocation7 [shape = 'u8[8192]{0}', space=vmem, size = 0x2000, scoped, tag = 'output window, operand 0, single buffered']
    %8 = vsyncpa [#allocation3], 0
    %9 = vsyncpa [#allocation6], 0
    %10 = vsyncpa [#allocation4], 0
    // Predicated region
    $region2: #{tpu_custom_call.1} parent=1 // pred_check
      _
    $region3: #{tpu_custom_call.1} parent=1 // pred_check_branch
      %12 = sbr.rel (0) target = $region5
    $region4: #{tpu_custom_call.1} parent=1 // pred_region
      %14 = vsyncadd [#allocation3], 0
      %s15 = sshll.u32 %s0, 4
      %s16 = int_to_ptr.hbm [resolvable:$true] %s15
      %s17 = sshll.u32 [#allocation2], 4
      %s18 = int_to_ptr.vmem [resolvable:$true] %s17
      %23 = dma.hbm_to_vmem [thread:$0]  %s16, 128, %s18, [#allocation3], 64, 64, 4
    $region5: #{tpu_custom_call.1} parent=1 // pred_fallthru
      _
    // Predicated region
    $region6: #{tpu_custom_call.1} parent=1 // pred_check
      _
    $region7: #{tpu_custom_call.1} parent=1 // pred_check_branch
      %25 = sbr.rel (0) target = $region9
    $region8: #{tpu_custom_call.1} parent=1 // pred_region
      %27 = vsyncadd [#allocation6], 0
      %s28 = sshll.u32 %s1, 4
      %s29 = int_to_ptr.hbm [resolvable:$true] %s28
      %s30 = sshll.u32 [#allocation5], 4
      %s31 = int_to_ptr.vmem [resolvable:$true] %s30
      %36 = dma.hbm_to_vmem [thread:$0]  %s29, 1024, %s31, [#allocation6], 64, 64, 4
    $region9: #{tpu_custom_call.1} parent=1 // pred_fallthru
      _
    // Predicated region
    $region10: #{tpu_custom_call.1} parent=1 // pred_check
      _
    $region11: #{tpu_custom_call.1} parent=1 // pred_check_branch
      %38 = sbr.rel (0) target = $region13
    $region12: #{tpu_custom_call.1} parent=1 // pred_region
      _
    $region13: #{tpu_custom_call.1} parent=1 // pred_fallthru
      _
    // Predicated region
    $region14: #{tpu_custom_call.1} parent=1 // pred_check
      _
    $region15: #{tpu_custom_call.1} parent=1 // pred_check_branch
      %40 = sbr.rel (0) target = $region17
    $region16: #{tpu_custom_call.1} parent=1 // pred_region
      %42 = dma.done [#allocation3], 128
    $region17: #{tpu_custom_call.1} parent=1 // pred_fallthru
      _
    // Predicated region
    $region18: #{tpu_custom_call.1} parent=1 // pred_check
      _
    $region19: #{tpu_custom_call.1} parent=1 // pred_check_branch
      %44 = sbr.rel (0) target = $region21
    $region20: #{tpu_custom_call.1} parent=1 // pred_region
      %46 = dma.done [#allocation6], 1024
    $region21: #{tpu_custom_call.1} parent=1 // pred_fallthru
      _
    %v47 = vld [vmem:[#allocation2] sm:$0xf]
    %v48 = vld [vmem:[#allocation2 + $0x4] sm:$0xf]
    %v49 = vld [vmem:[#allocation5] sm:$0xf]
    %v50 = vld [vmem:[#allocation5 + $0x4] sm:$0xf]
    %v51 = vld [vmem:[#allocation5 + $0x8] sm:$0xf]
    %v52 = vld [vmem:[#allocation5 + $0xc] sm:$0xf]
    %v53 = vld [vmem:[#allocation5 + $0x10] sm:$0xf]
    %v54 = vld [vmem:[#allocation5 + $0x14] sm:$0xf]
    %v55 = vld [vmem:[#allocation5 + $0x18] sm:$0xf]
    %v56 = vld [vmem:[#allocation5 + $0x1c] sm:$0xf]
    %v57 = vld [vmem:[#allocation5 + $0x20] sm:$0xf]
    %v58 = vld [vmem:[#allocation5 + $0x24] sm:$0xf]
    %v59 = vld [vmem:[#allocation5 + $0x28] sm:$0xf]
    %v60 = vld [vmem:[#allocation5 + $0x2c] sm:$0xf]
    %v61 = vld [vmem:[#allocation5 + $0x30] sm:$0xf]
    %v62 = vld [vmem:[#allocation5 + $0x34] sm:$0xf]
    %v63 = vld [vmem:[#allocation5 + $0x38] sm:$0xf]
    %v64 = vld [vmem:[#allocation5 + $0x3c] sm:$0xf]
    %v65 = vld [vmem:[%s2] sm:$0x1]
    %v67 = vperm.slane %v65, 0
    %v71 = vunpack.c.l.b16 %v47
    %v72 = vunpack.c.l.b16 %v48
    %v73 = vpack.c.b16 %v72, %v71
    %v91 = vunpack.c.l.b16 %v49
    %v92 = vunpack.c.l.b16 %v50
    %v93 = vunpack.c.l.b16 %v51
    %v94 = vunpack.c.l.b16 %v52
    %v95 = vunpack.c.l.b16 %v53
    %v96 = vunpack.c.l.b16 %v54
    %v97 = vunpack.c.l.b16 %v55
    %v98 = vunpack.c.l.b16 %v56
    %v99 = vunpack.c.l.b16 %v57
    %v100 = vunpack.c.l.b16 %v58
    %v101 = vunpack.c.l.b16 %v59
    %v102 = vunpack.c.l.b16 %v60
    %v103 = vunpack.c.l.b16 %v61
    %v104 = vunpack.c.l.b16 %v62
    %v105 = vunpack.c.l.b16 %v63
    %v106 = vunpack.c.l.b16 %v64
    %v107 = vpack.c.b16 %v92, %v91
    %v108 = vpack.c.b16 %v94, %v93
    %v109 = vpack.c.b16 %v96, %v95
    %v110 = vpack.c.b16 %v98, %v97
    %v111 = vpack.c.b16 %v100, %v99
    %v112 = vpack.c.b16 %v102, %v101
    %v113 = vpack.c.b16 %v104, %v103
    %v114 = vpack.c.b16 %v106, %v105
    %123 = vmatpush.bf16.msra.mxu0 %v114
    %124 = vmatpush.bf16.msra.mxu0 %v113
    %125 = vmatpush.bf16.msra.mxu0 %v112
    %126 = vmatpush.bf16.msra.mxu0 %v111
    %127 = vmatpush.bf16.msra.mxu0 %v110
    %128 = vmatpush.bf16.msra.mxu0 %v109
    %129 = vmatpush.bf16.msra.mxu0 %v108
    %130 = vmatpush.bf16.msra.mxu0 %v107
    %131 = vmatmul.bf16.gmra.mxu0 %v73
    %v132 = vpop.f32.mrf.mxu0
    %v133 = vadd.f32 %v67, %v132
    %v134 = vpop.f32.mrf.mxu0
    %v135 = vadd.f32 %v67, %v134
    %136 = vdwg.mxu0
    %137 = vst [vmem:[#allocation7] sm:$0xff] %v133
    %138 = vst [vmem:[#allocation7 + $0x8] sm:$0xff] %v135
    // Predicated region
    $region22: #{tpu_custom_call.1} parent=1 // pred_check
      _
    $region23: #{tpu_custom_call.1} parent=1 // pred_check_branch
      %140 = sbr.rel (0) target = $region25
    $region24: #{tpu_custom_call.1} parent=1 // pred_region
      %142 = vsyncadd [#allocation4], 0
      %s143 = sshll.u32 [#allocation7], 4
      %s144 = int_to_ptr.vmem [resolvable:$true] %s143
      %s145 = sshll.u32 %s3, 4
      %s146 = int_to_ptr.hbm [resolvable:$true] %s145
      %151 = dma.vmem_to_hbm [thread:$0]  %s144, 256, %s146, [#allocation4], 128, 128, 8
    $region25: #{tpu_custom_call.1} parent=1 // pred_fallthru
      _
    // Predicated region
    $region26: #{tpu_custom_call.1} parent=1 // pred_check
      _
    $region27: #{tpu_custom_call.1} parent=1 // pred_check_branch
      %153 = sbr.rel (0) target = $region29
    $region28: #{tpu_custom_call.1} parent=1 // pred_region
      %155 = dma.done [#allocation4], 256
    $region29: #{tpu_custom_call.1} parent=1 // pred_fallthru
      _
    %156 = vsyncpa [#allocation3], 1
    %157 = vsyncpa [#allocation6], 1
    %158 = vsyncpa [#allocation4], 1

</llo_original>
